<compile_context>
chip_gen: v7x
topology: tpu7x:2x2x1
jax: 0.10.0
libtpu: 0.0.40
codegen_flags: <defaults>
</compile_context>

<pallas_src>
import functools

import jax
import jax.numpy as jnp
from jax.experimental import pallas as pl
from jax.experimental.pallas import tpu as pltpu


_MiB = 1024 * 1024
_FUSED_BLOCK_CAP = 10 * _MiB   # per-batch (C, H*W) slab cap -> fused path (v7x safe)
_TILE_BYTES_CAP = 4 * _MiB     # per-block cap for the streaming two-pass path
_TN_CAP = 8192                 # lane-axis tile cap
_TM_CAP = 512                  # sublane-axis tile cap
_VMEM_LIMIT_CAP = 48 * _MiB    # leave headroom under v7x's 64 MiB


# ---------------------------------------------------------------------------
# Fused kernel: per-batch pooling + shared MLP + sigmoid + rescale.
#   x_ref / o_ref: (1, C, S) block,  S = H*W (lane-dense).
#   w1: (Cr, C)  b1t: (Cr, 1)  w2: (C, Cr)  b2t: (C, 1)
# ---------------------------------------------------------------------------
def _fused_kernel(x_ref, w1_ref, b1_ref, w2_ref, b2_ref, o_ref):
    xb = x_ref[0].astype(jnp.float32)                          # (C, S)
    inv_s = jnp.float32(1.0 / xb.shape[-1])
    avg = jnp.sum(xb, axis=-1, keepdims=True) * inv_s          # (C, 1)
    mx = jnp.max(xb, axis=-1, keepdims=True)                   # (C, 1)

    w1 = w1_ref[...]
    b1 = b1_ref[...]
    w2 = w2_ref[...]
    b2 = b2_ref[...]

    # Shared MLP on both pooled vectors; second linear is linear, so the two
    # hidden activations can be summed before the second matmul.
    h = (jnp.maximum(jnp.dot(w1, avg, preferred_element_type=jnp.float32) + b1, 0.0)
         + jnp.maximum(jnp.dot(w1, mx, preferred_element_type=jnp.float32) + b1, 0.0))
    att = jnp.dot(w2, h, preferred_element_type=jnp.float32) + 2.0 * b2   # (C, 1)
    scale = jax.nn.sigmoid(att)                                           # (C, 1)

    o_ref[0] = (xb * scale).astype(o_ref.dtype)


# ---------------------------------------------------------------------------
# Two-pass path, pass 1: tiled global sum / max pooling.
#   Output blocks (TM, 1) are resident across the j (spatial) axis, so we
#   accumulate directly into them — no scratch, no finalize copy.
# ---------------------------------------------------------------------------
def _pool_kernel(x_ref, sum_ref, max_ref, *, s_total, tn, mask_cols):
    j = pl.program_id(1)

    @pl.when(j == 0)
    def _init():
        sum_ref[...] = jnp.zeros_like(sum_ref)
        max_ref[...] = jnp.full_like(max_ref, -jnp.inf)

    blk = x_ref[...].astype(jnp.float32)                       # (TM, TN)
    if mask_cols:
        col = jax.lax.broadcasted_iota(jnp.int32, blk.shape, 1) + j * tn
        valid = col < s_total
        blk_sum = jnp.where(valid, blk, 0.0)
        blk_max = jnp.where(valid, blk, -jnp.inf)
    else:
        blk_sum = blk
        blk_max = blk

    sum_ref[...] += jnp.sum(blk_sum, axis=-1, keepdims=True)
    max_ref[...] = jnp.maximum(max_ref[...],
                               jnp.max(blk_max, axis=-1, keepdims=True))


# ---------------------------------------------------------------------------
# Two-pass path, pass 2: fully parallel broadcast multiply.
# ---------------------------------------------------------------------------
def _rescale_kernel(x_ref, scale_ref, o_ref):
    o_ref[...] = x_ref[...] * scale_ref[...]                   # (TM,1) -> (TM,TN)


# ---------------------------------------------------------------------------
# Tiling helpers.
# ---------------------------------------------------------------------------
def _sublane_step(dtype):
    return {4: 8, 2: 16, 1: 32}.get(jnp.dtype(dtype).itemsize, 8)


def _pick_tile(n, step, cap):
    """Aligned tile <= cap.  Prefer an exact divisor of n; otherwise return the
    aligned cap and let the caller mask / rely on dropped partial writes."""
    if n <= step:
        return n                               # full dim (always legal)
    cap = max(step, (min(n, cap) // step) * step)
    best = None
    for t in range(step, cap + 1, step):
        if n % t == 0:
            best = t
    return best if best is not None else cap


def _vmem_limit(block_bytes, factor):
    return int(min(_VMEM_LIMIT_CAP, max(16 * _MiB, factor * block_bytes)))


# ---------------------------------------------------------------------------
# Fused path wrapper.
# ---------------------------------------------------------------------------
def _fused_path(x, w1, b1, w2, b2):
    B, C, H, W = x.shape
    S = H * W
    Cr = w1.shape[0]

    x3 = x.reshape(B, C, S)
    b1t = b1.reshape(Cr, 1).astype(jnp.float32)
    b2t = b2.reshape(C, 1).astype(jnp.float32)
    w1f = w1.astype(jnp.float32)
    w2f = w2.astype(jnp.float32)

    block_bytes = C * S * jnp.dtype(x.dtype).itemsize

    out3 = pl.pallas_call(
        _fused_kernel,
        out_shape=jax.ShapeDtypeStruct((B, C, S), x.dtype),
        grid_spec=pltpu.PrefetchScalarGridSpec(
            num_scalar_prefetch=0,
            grid=(B,),
            in_specs=[
                pl.BlockSpec((1, C, S), lambda b: (b, 0, 0)),
                pl.BlockSpec((Cr, C), lambda b: (0, 0)),
                pl.BlockSpec((Cr, 1), lambda b: (0, 0)),
                pl.BlockSpec((C, Cr), lambda b: (0, 0)),
                pl.BlockSpec((C, 1), lambda b: (0, 0)),
            ],
            out_specs=pl.BlockSpec((1, C, S), lambda b: (b, 0, 0)),
        ),
        compiler_params=pltpu.CompilerParams(
            dimension_semantics=("parallel",),
            vmem_limit_bytes=_vmem_limit(block_bytes, 5),
        ),
    )(x3, w1f, b1t, w2f, b2t)

    return out3.reshape(B, C, H, W)


# ---------------------------------------------------------------------------
# Two-pass path wrapper (large-shape fallback).
# ---------------------------------------------------------------------------
def _two_pass_path(x, w1, b1, w2, b2):
    B, C, H, W = x.shape
    R, S = B * C, H * W
    itemsize = jnp.dtype(x.dtype).itemsize

    x2 = x.reshape(R, S)                                  # lane-dense layout

    row_step = _sublane_step(x.dtype)
    TN = _pick_tile(S, 128, _TN_CAP)
    tm_cap = max(row_step, min(_TM_CAP, _TILE_BYTES_CAP // max(1, TN * itemsize)))
    TM = _pick_tile(R, row_step, tm_cap)
    # v7x megacore: keep the parallel row axis with >= 2 tiles when possible.
    if pl.cdiv(R, TM) < 2 and R > row_step:
        TM = max(row_step, (pl.cdiv(R, 2) // row_step) * row_step)

    grid = (pl.cdiv(R, TM), pl.cdiv(S, TN))
    mask_cols = (S % TN) != 0
    tile_bytes = TM * TN * itemsize
    vmem_limit = _vmem_limit(tile_bytes, 6)

    # ---- Pass 1: pooled sums / maxes per (batch, channel) row ------------
    pool_kernel = functools.partial(
        _pool_kernel, s_total=S, tn=TN, mask_cols=mask_cols)
    sum_pool, max_pool = pl.pallas_call(
        pool_kernel,
        out_shape=(
            jax.ShapeDtypeStruct((R, 1), jnp.float32),
            jax.ShapeDtypeStruct((R, 1), jnp.float32),
        ),
        grid_spec=pltpu.PrefetchScalarGridSpec(
            num_scalar_prefetch=0,
            grid=grid,
            in_specs=[pl.BlockSpec((TM, TN), lambda i, j: (i, j))],
            out_specs=[
                pl.BlockSpec((TM, 1), lambda i, j: (i, 0)),
                pl.BlockSpec((TM, 1), lambda i, j: (i, 0)),
            ],
        ),
        compiler_params=pltpu.CompilerParams(
            dimension_semantics=("parallel", "arbitrary"),
            vmem_limit_bytes=vmem_limit,
        ),
    )(x2)

    # ---- Tiny shared MLP: both branches as ONE stacked matmul -------------
    avg_pool = (sum_pool * jnp.float32(1.0 / S)).reshape(B, C)
    max_pool = max_pool.reshape(B, C)
    pooled = jnp.concatenate([avg_pool, max_pool], axis=0)     # (2B, C)
    h = jnp.maximum(pooled @ w1.T + b1, 0.0)                   # (2B, Cr)
    att = h @ w2.T + b2                                        # (2B, C)
    scale = jax.nn.sigmoid(att[:B] + att[B:])                  # (B, C)
    scale_r = scale.reshape(R, 1).astype(x.dtype)

    # ---- Pass 2: tiled, fully parallel broadcast multiply ------------------
    out2 = pl.pallas_call(
        _rescale_kernel,
        out_shape=jax.ShapeDtypeStruct((R, S), x.dtype),
        grid_spec=pltpu.PrefetchScalarGridSpec(
            num_scalar_prefetch=0,
            grid=grid,
            in_specs=[
                pl.BlockSpec((TM, TN), lambda i, j: (i, j)),
                pl.BlockSpec((TM, 1), lambda i, j: (i, 0)),
            ],
            out_specs=pl.BlockSpec((TM, TN), lambda i, j: (i, j)),
        ),
        compiler_params=pltpu.CompilerParams(
            dimension_semantics=("parallel", "parallel"),
            vmem_limit_bytes=vmem_limit,
        ),
    )(x2, scale_r)

    return out2.reshape(B, C, H, W)


# ---------------------------------------------------------------------------
# Public entry point.
# ---------------------------------------------------------------------------
@functools.partial(jax.jit, static_argnames=("force_two_pass",))
def channel_attention(x, w1, b1, w2, b2, force_two_pass=False):
    """x: (B, C, H, W); returns x * sigmoid(MLP(avg_pool) + MLP(max_pool))."""
    B, C, H, W = x.shape
    slab_bytes = C * H * W * jnp.dtype(x.dtype).itemsize
    if (not force_two_pass) and slab_bytes <= _FUSED_BLOCK_CAP:
        return _fused_path(x, w1, b1, w2, b2)
    return _two_pass_path(x, w1, b1, w2, b2)


def reference(x, w1, b1, w2, b2):
    avg_pool = jnp.mean(x, axis=(2, 3))
    max_pool = jnp.max(x, axis=(2, 3))

    def mlp(p):
        h = jnp.maximum(p @ w1.T + b1, 0.0)
        return h @ w2.T + b2

    scale = jax.nn.sigmoid(mlp(avg_pool) + mlp(max_pool))
    return x * scale[:, :, None, None]


if __name__ == "__main__":
    # Small shapes consistent with the module: gate_channels=4, reduction_ratio=2.
    B, C, H, W = 2, 4, 16, 16
    reduction_ratio = 2
    Cr = C // reduction_ratio

    key = jax.random.PRNGKey(0)
    kx, k1, k2, k3, k4 = jax.random.split(key, 5)

    x = jax.random.normal(kx, (B, C, H, W), dtype=jnp.float32)
    # Parameter shapes match nn.Linear(C, Cr) / nn.Linear(Cr, C).
    w1 = jax.random.normal(k1, (Cr, C), dtype=jnp.float32) * 0.5
    b1 = jax.random.normal(k2, (1, Cr), dtype=jnp.float32) * 0.1
    w2 = jax.random.normal(k3, (C, Cr), dtype=jnp.float32) * 0.5
    b2 = jax.random.normal(k4, (1, C), dtype=jnp.float32) * 0.1

    ref = reference(x, w1, b1, w2, b2)

    # Fused single-pass path (default for this shape).
    out_fused = jax.block_until_ready(channel_attention(x, w1, b1, w2, b2))
    assert out_fused.shape == x.shape
    assert jnp.allclose(out_fused, ref, atol=1e-5, rtol=1e-5), "fused path mismatch"

    # Two-pass fallback path (exercised explicitly for coverage).
    out_tp = jax.block_until_ready(
        channel_attention(x, w1, b1, w2, b2, force_two_pass=True))
    assert out_tp.shape == x.shape
    assert jnp.allclose(out_tp, ref, atol=1e-5, rtol=1e-5), "two-pass path mismatch"

    print("KERNEL_OK")
</pallas_src>

<mosaic_0001>
module attributes {stable_mosaic.version = 11 : i64} {
  func.func @_fused_kernel(%arg0: i32, %arg1: memref<1x4x256xf32, #tpu.memory_space<vmem>>, %arg2: memref<2x4xf32, #tpu.memory_space<vmem>>, %arg3: memref<2x1xf32, #tpu.memory_space<vmem>>, %arg4: memref<4x2xf32, #tpu.memory_space<vmem>>, %arg5: memref<4x1xf32, #tpu.memory_space<vmem>>, %arg6: memref<1x4x256xf32, #tpu.memory_space<vmem>>) attributes {dimension_semantics = [#tpu.dimension_semantics<parallel>], iteration_bounds = array<i64: 2>, scalar_prefetch = 0 : i64, scratch_operands = 0 : i64, tpu.core_type = #tpu.core_type<tc>, window_params = [{transform_indices = @transform_0, window_bounds = array<i64: 1, 4, 256>}, {pipeline_mode = #tpu.pipeline_mode<synchronous>, transform_indices = @transform_1, window_bounds = array<i64: 2, 4>}, {pipeline_mode = #tpu.pipeline_mode<synchronous>, transform_indices = @transform_2, window_bounds = array<i64: 2, 1>}, {pipeline_mode = #tpu.pipeline_mode<synchronous>, transform_indices = @transform_3, window_bounds = array<i64: 4, 2>}, {pipeline_mode = #tpu.pipeline_mode<synchronous>, transform_indices = @transform_4, window_bounds = array<i64: 4, 1>}, {transform_indices = @transform_5, window_bounds = array<i64: 1, 4, 256>}]} {
    %c0 = arith.constant 0 : index
    %c0_0 = arith.constant 0 : index
    %c0_1 = arith.constant 0 : index
    %0 = vector.load %arg1[%c0, %c0_0, %c0_1] : memref<1x4x256xf32, #tpu.memory_space<vmem>>, vector<1x4x256xf32>
    %1 = vector.shape_cast %0 : vector<1x4x256xf32> to vector<4x256xf32>
    %cst = arith.constant dense<0.000000e+00> : vector<4xf32>
    %2 = vector.multi_reduction <add>, %1, %cst [1] : vector<4x256xf32> to vector<4xf32>
    %3 = vector.shape_cast %2 : vector<4xf32> to vector<4x1xf32>
    %cst_2 = arith.constant 3.906250e-03 : f32
    %4 = vector.broadcast %cst_2 : f32 to vector<4x1xf32>
    %5 = arith.mulf %3, %4 : vector<4x1xf32>
    %cst_3 = arith.constant dense<0xFF800000> : vector<4xf32>
    %6 = vector.multi_reduction <maximumf>, %1, %cst_3 [1] : vector<4x256xf32> to vector<4xf32>
    %7 = vector.shape_cast %6 : vector<4xf32> to vector<4x1xf32>
    %c0_4 = arith.constant 0 : index
    %c0_5 = arith.constant 0 : index
    %8 = vector.load %arg2[%c0_4, %c0_5] : memref<2x4xf32, #tpu.memory_space<vmem>>, vector<2x4xf32>
    %c0_6 = arith.constant 0 : index
    %c0_7 = arith.constant 0 : index
    %9 = vector.load %arg3[%c0_6, %c0_7] : memref<2x1xf32, #tpu.memory_space<vmem>>, vector<2x1xf32>
    %c0_8 = arith.constant 0 : index
    %c0_9 = arith.constant 0 : index
    %10 = vector.load %arg4[%c0_8, %c0_9] : memref<4x2xf32, #tpu.memory_space<vmem>>, vector<4x2xf32>
    %c0_10 = arith.constant 0 : index
    %c0_11 = arith.constant 0 : index
    %11 = vector.load %arg5[%c0_10, %c0_11] : memref<4x1xf32, #tpu.memory_space<vmem>>, vector<4x1xf32>
    %cst_12 = arith.constant dense<0.000000e+00> : vector<2x1xf32>
    %12 = tpu.matmul %8, %5, %cst_12 {dimension_numbers = #tpu.dot_dimension_numbers<[1], [0], [0], [1], [0, 0, 1, 1], [], []>} : vector<2x4xf32>, vector<4x1xf32>, vector<2x1xf32> -> vector<2x1xf32>
    %13 = arith.addf %12, %9 : vector<2x1xf32>
    %cst_13 = arith.constant 0.000000e+00 : f32
    %14 = vector.broadcast %cst_13 : f32 to vector<2x1xf32>
    %15 = arith.maximumf %13, %14 : vector<2x1xf32>
    %cst_14 = arith.constant dense<0.000000e+00> : vector<2x1xf32>
    %16 = tpu.matmul %8, %7, %cst_14 {dimension_numbers = #tpu.dot_dimension_numbers<[1], [0], [0], [1], [0, 0, 1, 1], [], []>} : vector<2x4xf32>, vector<4x1xf32>, vector<2x1xf32> -> vector<2x1xf32>
    %17 = arith.addf %16, %9 : vector<2x1xf32>
    %cst_15 = arith.constant 0.000000e+00 : f32
    %18 = vector.broadcast %cst_15 : f32 to vector<2x1xf32>
    %19 = arith.maximumf %17, %18 : vector<2x1xf32>
    %20 = arith.addf %15, %19 : vector<2x1xf32>
    %cst_16 = arith.constant dense<0.000000e+00> : vector<4x1xf32>
    %21 = tpu.matmul %10, %20, %cst_16 {dimension_numbers = #tpu.dot_dimension_numbers<[1], [0], [0], [1], [0, 0, 1, 1], [], []>} : vector<4x2xf32>, vector<2x1xf32>, vector<4x1xf32> -> vector<4x1xf32>
    %cst_17 = arith.constant 2.000000e+00 : f32
    %22 = vector.broadcast %cst_17 : f32 to vector<4x1xf32>
    %23 = arith.mulf %22, %11 : vector<4x1xf32>
    %24 = arith.addf %21, %23 : vector<4x1xf32>
    %25 = arith.negf %24 : vector<4x1xf32>
    %26 = math.exp %25 : vector<4x1xf32>
    %cst_18 = arith.constant 1.000000e+00 : f32
    %27 = vector.broadcast %cst_18 : f32 to vector<4x1xf32>
    %28 = arith.addf %27, %26 : vector<4x1xf32>
    %29 = arith.divf %27, %28 : vector<4x1xf32>
    %30 = vector.broadcast %29 : vector<4x1xf32> to vector<4x256xf32>
    %31 = arith.mulf %1, %30 : vector<4x256xf32>
    %c0_19 = arith.constant 0 : index
    %c0_20 = arith.constant 0 : index
    %c0_21 = arith.constant 0 : index
    %32 = vector.load %arg6[%c0_19, %c0_20, %c0_21] : memref<1x4x256xf32, #tpu.memory_space<vmem>>, vector<1x4x256xf32>
    %33 = vector.shape_cast %32 : vector<1x4x256xf32> to vector<4x256xf32>
    %34 = vector.shape_cast %31 : vector<4x256xf32> to vector<1x4x256xf32>
    tpu.vector_store %arg6[%c0_19, %c0_20, %c0_21], %34 {strides = array<i32>} : memref<1x4x256xf32, #tpu.memory_space<vmem>>, vector<1x4x256xf32>,
    return
  }
  func.func @transform_0(%arg0: i32) -> (i32, i32, i32) {
    %c0_i32 = arith.constant 0 : i32
    %c0_i32_0 = arith.constant 0 : i32
    %c0_i32_1 = arith.constant 0 : i32
    return %arg0, %c0_i32, %c0_i32_0 : i32, i32, i32
  }
  func.func @transform_1(%arg0: i32) -> (i32, i32) {
    %c0_i32 = arith.constant 0 : i32
    %c0_i32_0 = arith.constant 0 : i32
    %c0_i32_1 = arith.constant 0 : i32
    return %c0_i32, %c0_i32_0 : i32, i32
  }
  func.func @transform_2(%arg0: i32) -> (i32, i32) {
    %c0_i32 = arith.constant 0 : i32
    %c0_i32_0 = arith.constant 0 : i32
    %c0_i32_1 = arith.constant 0 : i32
    return %c0_i32, %c0_i32_0 : i32, i32
  }
  func.func @transform_3(%arg0: i32) -> (i32, i32) {
    %c0_i32 = arith.constant 0 : i32
    %c0_i32_0 = arith.constant 0 : i32
    %c0_i32_1 = arith.constant 0 : i32
    return %c0_i32, %c0_i32_0 : i32, i32
  }
  func.func @transform_4(%arg0: i32) -> (i32, i32) {
    %c0_i32 = arith.constant 0 : i32
    %c0_i32_0 = arith.constant 0 : i32
    %c0_i32_1 = arith.constant 0 : i32
    return %c0_i32, %c0_i32_0 : i32, i32
  }
  func.func @transform_5(%arg0: i32) -> (i32, i32, i32) {
    %c0_i32 = arith.constant 0 : i32
    %c0_i32_0 = arith.constant 0 : i32
    %c0_i32_1 = arith.constant 0 : i32
    return %arg0, %c0_i32, %c0_i32_0 : i32, i32, i32
  }
}

</mosaic_0001>

<llo_original>
// kernel: channel_attention.1
$region0: #{channel_attention.1}
  #allocation0 [shape = 'u32[]', space=smem, size = 0x4, offset = 0x4, fixed_abs, tag = 'smem constant byte address 0x4 - core index']
  #allocation1 [shape = 'u32[144,128]{1,0:T(1,128)}', space=vmem, size = 0x12000, scoped, tag = 'internal scratch']
  %s0 = inlined_call_operand.vmem [shape: f32[2,4,256], index: 0, kind: input, shape index: {}]
  %s1 = inlined_call_operand.vmem [shape: f32[2,4], index: 1, kind: input, shape index: {}]
  %s2 = inlined_call_operand.vmem [shape: f32[2,1], index: 2, kind: input, shape index: {}]
  %s3 = inlined_call_operand.vmem [shape: f32[4,2], index: 3, kind: input, shape index: {}]
  %s4 = inlined_call_operand.vmem [shape: f32[4,1], index: 4, kind: input, shape index: {}]
  %s5 = inlined_call_operand.vmem [shape: f32[2,4,256], index: 5, kind: output, shape index: {}]
  %s6 = sld [smem:[#allocation0]]
  $region53: #{channel_attention.1} parent=0
    _
  %s8 = ssub.s32 1, %s6
  %s9 = scalar_select 0, %s8, %s6
  loop: start=0, step=1, limit=4
  $region2: #{channel_attention.1} parent=0 // loop_pre_header
    _
  $region3: #{channel_attention.1} parent=0 // loop_header
    %s11 = sphi 0, %s15
    %p12 = scmp.ge.s32.totalorder %s11, 4
    %s21 = sphi 0, %s23
    %s24 = sphi 0, %s21
    %s25 = sphi 0, %s24
    %s41 = sphi 0, %s25
    %s45 = sphi 0, %s45
    %s47 = sphi 0, %s45
    %s48 = sphi 0, %s47
    %s62 = sphi 0, %s48
    %s66 = sphi 0, %s66
    %s68 = sphi 0, %s66
    %s69 = sphi 0, %s68
    %s83 = sphi 0, %s69
    %s87 = sphi 0, %s87
    %s89 = sphi 0, %s87
    %s90 = sphi 0, %s89
    %s104 = sphi 0, %s90
    %s108 = sphi 0, %s108
    %s110 = sphi 0, %s108
    %s111 = sphi 0, %s110
    %s125 = sphi 0, %s111
    %s131 = sphi 0, %s133
    %s134 = sphi 0, %s131
    %s135 = sphi 0, %s134
    %s151 = sphi 0, %s135
  $region4: #{channel_attention.1} parent=0 // loop_header_branch
    %14 = sbr.rel (%p12) target = $region8
  $region5: #{channel_attention.1} parent=0 // loop_body
    %s16 = ssub.s32 %s11, 1
    %s17 = ssub.s32 %s11, 2
    %s18 = sadd.s32 %s11, 1
    %s19 = ssub.s32 %s11, %s18
    %p20 = scmp.eq.s32.totalorder %s19, 0
    %s22 = sadd.s32 %s21, 1
    %s23 = scalar_select %p20, %s21, %s22
    %p26 = pneg %p20
    %p27 = scmp.eq.s32.totalorder %s11, 1
    %p28 = por %p26, %p27
    %p29 = scmp.ne.s32.totalorder %s21, %s24
    %p30 = scmp.eq.s32.totalorder %s11, 0
    %p31 = por %p29, %p30
    %p32 = scmp.ne.s32.totalorder %s21, %s24
    %p33 = scmp.eq.s32.totalorder %s16, 1
    %p34 = por %p32, %p33
    %p35 = scmp.ne.s32.totalorder %s24, %s25
    %p36 = scmp.eq.s32.totalorder %s16, 0
    %p37 = por %p35, %p36
    %p38 = scmp.ne.s32.totalorder %s24, %s25
    %p39 = scmp.eq.s32.totalorder %s17, 1
    %p40 = por %p38, %p39
    %p42 = scmp.ne.s32.totalorder %s25, %s41
    %p43 = scmp.eq.s32.totalorder %s17, 0
    %p44 = por %p42, %p43
    %s46 = sadd.s32 %s45, 1
    %p49 = scmp.eq.s32.totalorder %s11, 1
    %p50 = scmp.ne.s32.totalorder %s45, %s47
    %p51 = scmp.eq.s32.totalorder %s11, 0
    %p52 = por %p50, %p51
    %p53 = scmp.ne.s32.totalorder %s45, %s47
    %p54 = scmp.eq.s32.totalorder %s16, 1
    %p55 = por %p53, %p54
    %p56 = scmp.ne.s32.totalorder %s47, %s48
    %p57 = scmp.eq.s32.totalorder %s16, 0
    %p58 = por %p56, %p57
    %p59 = scmp.ne.s32.totalorder %s47, %s48
    %p60 = scmp.eq.s32.totalorder %s17, 1
    %p61 = por %p59, %p60
    %p63 = scmp.ne.s32.totalorder %s48, %s62
    %p64 = scmp.eq.s32.totalorder %s17, 0
    %p65 = por %p63, %p64
    %s67 = sadd.s32 %s66, 1
    %p70 = scmp.eq.s32.totalorder %s11, 1
    %p71 = scmp.ne.s32.totalorder %s66, %s68
    %p72 = scmp.eq.s32.totalorder %s11, 0
    %p73 = por %p71, %p72
    %p74 = scmp.ne.s32.totalorder %s66, %s68
    %p75 = scmp.eq.s32.totalorder %s16, 1
    %p76 = por %p74, %p75
    %p77 = scmp.ne.s32.totalorder %s68, %s69
    %p78 = scmp.eq.s32.totalorder %s16, 0
    %p79 = por %p77, %p78
    %p80 = scmp.ne.s32.totalorder %s68, %s69
    %p81 = scmp.eq.s32.totalorder %s17, 1
    %p82 = por %p80, %p81
    %p84 = scmp.ne.s32.totalorder %s69, %s83
    %p85 = scmp.eq.s32.totalorder %s17, 0
    %p86 = por %p84, %p85
    %s88 = sadd.s32 %s87, 1
    %p91 = scmp.eq.s32.totalorder %s11, 1
    %p92 = scmp.ne.s32.totalorder %s87, %s89
    %p93 = scmp.eq.s32.totalorder %s11, 0
    %p94 = por %p92, %p93
    %p95 = scmp.ne.s32.totalorder %s87, %s89
    %p96 = scmp.eq.s32.totalorder %s16, 1
    %p97 = por %p95, %p96
    %p98 = scmp.ne.s32.totalorder %s89, %s90
    %p99 = scmp.eq.s32.totalorder %s16, 0
    %p100 = por %p98, %p99
    %p101 = scmp.ne.s32.totalorder %s89, %s90
    %p102 = scmp.eq.s32.totalorder %s17, 1
    %p103 = por %p101, %p102
    %p105 = scmp.ne.s32.totalorder %s90, %s104
    %p106 = scmp.eq.s32.totalorder %s17, 0
    %p107 = por %p105, %p106
    %s109 = sadd.s32 %s108, 1
    %p112 = scmp.eq.s32.totalorder %s11, 1
    %p113 = scmp.ne.s32.totalorder %s108, %s110
    %p114 = scmp.eq.s32.totalorder %s11, 0
    %p115 = por %p113, %p114
    %p116 = scmp.ne.s32.totalorder %s108, %s110
    %p117 = scmp.eq.s32.totalorder %s16, 1
    %p118 = por %p116, %p117
    %p119 = scmp.ne.s32.totalorder %s110, %s111
    %p120 = scmp.eq.s32.totalorder %s16, 0
    %p121 = por %p119, %p120
    %p122 = scmp.ne.s32.totalorder %s110, %s111
    %p123 = scmp.eq.s32.totalorder %s17, 1
    %p124 = por %p122, %p123
    %p126 = scmp.ne.s32.totalorder %s111, %s125
    %p127 = scmp.eq.s32.totalorder %s17, 0
    %p128 = por %p126, %p127
    %s129 = ssub.s32 %s11, %s18
    %p130 = scmp.eq.s32.totalorder %s129, 0
    %s132 = sadd.s32 %s131, 1
    %s133 = scalar_select %p130, %s131, %s132
    %p136 = pneg %p130
    %p137 = scmp.eq.s32.totalorder %s11, 1
    %p138 = por %p136, %p137
    %p139 = scmp.ne.s32.totalorder %s131, %s134
    %p140 = scmp.eq.s32.totalorder %s11, 0
    %p141 = por %p139, %p140
    %p142 = scmp.ne.s32.totalorder %s131, %s134
    %p143 = scmp.eq.s32.totalorder %s16, 1
    %p144 = por %p142, %p143
    %p145 = scmp.ne.s32.totalorder %s134, %s135
    %p146 = scmp.eq.s32.totalorder %s16, 0
    %p147 = por %p145, %p146
    %p148 = scmp.ne.s32.totalorder %s134, %s135
    %p149 = scmp.eq.s32.totalorder %s17, 1
    %p150 = por %p148, %p149
    %p152 = scmp.ne.s32.totalorder %s135, %s151
    %p153 = scmp.eq.s32.totalorder %s17, 0
    %p154 = por %p152, %p153
    %p155 = scmp.le.s32.totalorder 1, %s11
    %p156 = scmp.lt.s32.totalorder %s11, 3
    %p157 = pnand %p155, %p156
    %p158 = pneg %p157
    // Predicated region
    $region9: #{channel_attention.1} parent=5 // pred_check
      _
    $region10: #{channel_attention.1} parent=5 // pred_check_branch
      %160 = sbr.rel (%p157) target = $region12
    $region11: #{channel_attention.1} parent=5 // pred_region
      %s161 = ssub.s32 %s11, 1
      // Predicated region
      $region13: #{channel_attention.1} parent=11 // pred_check
        %p162 = pneg %p58
      $region14: #{channel_attention.1} parent=11 // pred_check_branch
        %164 = sbr.rel (%p162) target = $region16
      $region15: #{channel_attention.1} parent=11 // pred_region
        _
      $region16: #{channel_attention.1} parent=11 // pred_fallthru
        _
      // Predicated region
      $region17: #{channel_attention.1} parent=11 // pred_check
        %p165 = pneg %p79
      $region18: #{channel_attention.1} parent=11 // pred_check_branch
        %167 = sbr.rel (%p165) target = $region20
      $region19: #{channel_attention.1} parent=11 // pred_region
        _
      $region20: #{channel_attention.1} parent=11 // pred_fallthru
        _
      // Predicated region
      $region21: #{channel_attention.1} parent=11 // pred_check
        %p168 = pneg %p100
      $region22: #{channel_attention.1} parent=11 // pred_check_branch
        %170 = sbr.rel (%p168) target = $region24
      $region23: #{channel_attention.1} parent=11 // pred_region
        _
      $region24: #{channel_attention.1} parent=11 // pred_fallthru
        _
      // Predicated region
      $region25: #{channel_attention.1} parent=11 // pred_check
        %p171 = pneg %p121
      $region26: #{channel_attention.1} parent=11 // pred_check_branch
        %173 = sbr.rel (%p171) target = $region28
      $region27: #{channel_attention.1} parent=11 // pred_region
        _
      $region28: #{channel_attention.1} parent=11 // pred_fallthru
        _
    $region12: #{channel_attention.1} parent=5 // pred_fallthru
      _
    %p174 = scmp.lt.s32.totalorder %s11, 2
    // Predicated region
    $region29: #{channel_attention.1} parent=5 // pred_check
      %p175 = pneg %p174
    $region30: #{channel_attention.1} parent=5 // pred_check_branch
      %177 = sbr.rel (%p175) target = $region32
    $region31: #{channel_attention.1} parent=5 // pred_region
      // Predicated region
      $region33: #{channel_attention.1} parent=31 // pred_check
        %p178 = pneg %p31
      $region34: #{channel_attention.1} parent=31 // pred_check_branch
        %180 = sbr.rel (%p178) target = $region36
      $region35: #{channel_attention.1} parent=31 // pred_region
        %p181 = scmp.lt.s32.totalorder %s11, 1
        %s182 = scalar_select %p181, %s11, 1
        %s183 = smul.addr %s182, 2
        %s184 = smul.addr %s183, 4
        %s185 = scalar_lea.vmem %s0, %s184
      $region36: #{channel_attention.1} parent=31 // pred_fallthru
        _
    $region32: #{channel_attention.1} parent=5 // pred_fallthru
      _
    %p186 = scmp.le.s32.totalorder 1, %s11
    %p187 = scmp.lt.s32.totalorder %s11, 3
    %p188 = pnand %p186, %p187
    %p189 = pneg %p188
    // Predicated region
    $region37: #{channel_attention.1} parent=5 // pred_check
      _
    $region38: #{channel_attention.1} parent=5 // pred_check_branch
      %191 = sbr.rel (%p188) target = $region40
    $region39: #{channel_attention.1} parent=5 // pred_region
      %s192 = ssub.s32 %s11, 1
      %p193 = scmp.lt.s32.totalorder %s16, 1
      %s194 = scalar_select %p193, %s16, 1
      %s195 = smul.addr %s194, 2
      %s196 = smul.addr %s195, 4
      %s197 = scalar_lea.vmem %s0, %s196
      %p198 = pneg %p37
      %p199 = pneg %p34
      %p200 = pneg %p58
      %p201 = pneg %p55
      %p202 = pneg %p79
      %p203 = pneg %p76
      %p204 = pneg %p100
      %p205 = pneg %p97
      %p206 = pneg %p121
      %p207 = pneg %p118
      %p208 = pneg %p147
      %p209 = pneg %p144
      %p210 = scmp.lt.s32.totalorder %s16, 1
      %s211 = scalar_select %p210, %s16, 1
      %s212 = smul.addr %s211, 2
      %s213 = smul.addr %s212, 4
      %s214 = scalar_lea.vmem %s5, %s213
      %p215 = scmp.lt.s32.totalorder %s16, 1
      %s216 = scalar_select %p215, %s16, 1
      %s217 = smul.addr %s216, 2
      %s218 = smul.addr %s217, 4
      %s219 = scalar_lea.vmem %s0, %s218
      %p220 = scmp.lt.s32.totalorder %s16, 1
      %s221 = scalar_select %p220, %s16, 1
      %s222 = smul.addr %s221, 2
      %s223 = smul.addr %s222, 4
      %s224 = scalar_lea.vmem %s5, %s223
      %v225 = vld [vmem:[%s219] sm:$0xff]
      %v227 = vcombine.high %v225, %v225
      %vm229 = vcmask 1043456
      %v230 = vsel %vm229, %v225, 0.0
      %v231 = vsel %vm229, %v227, 0.0
      %v232 = vadd.f32 %v230, %v231
      %233 = vadd.xlane.f32.xlu0 %v232
      %v234 = vpop.xlane.xlu0 %233
      %v235 = vmul.f32 %v234, 0.00390625
      %v236 = vsel %vm229, %v225, -inf
      %v237 = vsel %vm229, %v227, -inf
      %v238 = vmax.f32 %v236, %v237
      %239 = vmax.xlane.f32.xlu0 %v238
      %v240 = vpop.xlane.xlu0 %239
      %v241 = vld [vmem:[%s1] sm:$0x3]
      %v242 = vld [vmem:[%s2] sm:$0x3]
      %v243 = vld [vmem:[%s3] sm:$0xf]
      %v244 = vld [vmem:[%s4] sm:$0xf]
      %vm245 = vcmask 31744
      %v247 = vsel %vm245, %v241, 0
      %v250 = vsel %vm229, %v235, 0
      %252 = vmatprep.subr.mxu0 0.0
      %253 = vmatpush1.msra.mxu0 %v250
      %254 = vmatprep.subr.mxu0 0.0
      %255 = vmatpush1.msra.mxu0 0.0
      %256 = vmatprep.subr.mxu0 0.0
      %257 = vmatpush1.msra.mxu0 0.0
      %258 = vmatprep.subr.mxu0 0.0
      %259 = vmatpush1.msra.mxu0 0.0
      %260 = vmatprep.subr.mxu0 0.0
      %261 = vmatpush1.msra.mxu0 0.0
      %262 = vmatprep.subr.mxu0 0.0
      %263 = vmatpush1.msra.mxu0 0.0
      %264 = vmatprep.subr.mxu0 0.0
      %265 = vmatpush1.msra.mxu0 0.0
      %266 = vmatprep.subr.mxu0 0.0
      %267 = vmatpush1.msra.mxu0 0.0
      %268 = vmatprep.subr.mxu0 0.0
      %269 = vmatpush1.msra.mxu0 0.0
      %270 = vmatprep.subr.mxu0 0.0
      %271 = vmatpush1.msra.mxu0 0.0
      %272 = vmatprep.subr.mxu0 0.0
      %273 = vmatpush1.msra.mxu0 0.0
      %274 = vmatprep.subr.mxu0 0.0
      %275 = vmatpush1.msra.mxu0 0.0
      %276 = vmatprep.subr.mxu0 0.0
      %277 = vmatpush1.msra.mxu0 0.0
      %278 = vmatprep.subr.mxu0 0.0
      %279 = vmatpush1.msra.mxu0 0.0
      %280 = vmatprep.subr.mxu0 0.0
      %281 = vmatpush1.msra.mxu0 0.0
      %282 = vmatprep.subr.mxu0 0.0
      %283 = vmatpush1.msra.mxu0 0.0
      %284 = vmatprep.subr.mxu0 0.0
      %285 = vmatpush1.msra.mxu0 0.0
      %286 = vmatprep.subr.mxu0 0.0
      %287 = vmatpush1.msra.mxu0 0.0
      %288 = vmatprep.subr.mxu0 0.0
      %289 = vmatpush1.msra.mxu0 0.0
      %290 = vmatprep.subr.mxu0 0.0
      %291 = vmatpush1.msra.mxu0 0.0
      %292 = vmatprep.subr.mxu0 0.0
      %293 = vmatpush1.msra.mxu0 0.0
      %294 = vmatprep.subr.mxu0 0.0
      %295 = vmatpush1.msra.mxu0 0.0
      %296 = vmatprep.subr.mxu0 0.0
      %297 = vmatpush1.msra.mxu0 0.0
      %298 = vmatprep.subr.mxu0 0.0
      %299 = vmatpush1.msra.mxu0 0.0
      %300 = vmatprep.subr.mxu0 0.0
      %301 = vmatpush1.msra.mxu0 0.0
      %302 = vmatprep.subr.mxu0 0.0
      %303 = vmatpush1.msra.mxu0 0.0
      %304 = vmatprep.subr.mxu0 0.0
      %305 = vmatpush1.msra.mxu0 0.0
      %306 = vmatprep.subr.mxu0 0.0
      %307 = vmatpush1.msra.mxu0 0.0
      %308 = vmatprep.subr.mxu0 0.0
      %309 = vmatpush1.msra.mxu0 0.0
      %310 = vmatprep.subr.mxu0 0.0
      %311 = vmatpush1.msra.mxu0 0.0
      %312 = vmatprep.subr.mxu0 0.0
      %313 = vmatpush1.msra.mxu0 0.0
      %314 = vmatprep.subr.mxu0 0.0
      %315 = vmatpush1.msra.mxu0 0.0
      %316 = vmatprep.mubr.f32.mxu0 0.0
      %317 = vmatmul.mubr.f32.gmra.mrb[0].mxu0 %v247
      %v318 = vpop.f32.mrb[0].mxu0
      %v319 = vadd.f32 %v242, %v318
      %v320 = vpop.f32.mrb[0].mxu0
      %321 = vdwg.mxu0
      %v322 = vmax.f32 %v319, 0.0
      %v324 = vsel %vm229, %v240, 0
      %326 = vmatprep.subr.mxu0 0.0
      %327 = vmatpush1.msra.mxu0 %v324
      %328 = vmatprep.subr.mxu0 0.0
      %329 = vmatpush1.msra.mxu0 0.0
      %330 = vmatprep.subr.mxu0 0.0
      %331 = vmatpush1.msra.mxu0 0.0
      %332 = vmatprep.subr.mxu0 0.0
      %333 = vmatpush1.msra.mxu0 0.0
      %334 = vmatprep.subr.mxu0 0.0
      %335 = vmatpush1.msra.mxu0 0.0
      %336 = vmatprep.subr.mxu0 0.0
      %337 = vmatpush1.msra.mxu0 0.0
      %338 = vmatprep.subr.mxu0 0.0
      %339 = vmatpush1.msra.mxu0 0.0
      %340 = vmatprep.subr.mxu0 0.0
      %341 = vmatpush1.msra.mxu0 0.0
      %342 = vmatprep.subr.mxu0 0.0
      %343 = vmatpush1.msra.mxu0 0.0
      %344 = vmatprep.subr.mxu0 0.0
      %345 = vmatpush1.msra.mxu0 0.0
      %346 = vmatprep.subr.mxu0 0.0
      %347 = vmatpush1.msra.mxu0 0.0
      %348 = vmatprep.subr.mxu0 0.0
      %349 = vmatpush1.msra.mxu0 0.0
      %350 = vmatprep.subr.mxu0 0.0
      %351 = vmatpush1.msra.mxu0 0.0
      %352 = vmatprep.subr.mxu0 0.0
      %353 = vmatpush1.msra.mxu0 0.0
      %354 = vmatprep.subr.mxu0 0.0
      %355 = vmatpush1.msra.mxu0 0.0
      %356 = vmatprep.subr.mxu0 0.0
      %357 = vmatpush1.msra.mxu0 0.0
      %358 = vmatprep.subr.mxu0 0.0
      %359 = vmatpush1.msra.mxu0 0.0
      %360 = vmatprep.subr.mxu0 0.0
      %361 = vmatpush1.msra.mxu0 0.0
      %362 = vmatprep.subr.mxu0 0.0
      %363 = vmatpush1.msra.mxu0 0.0
      %364 = vmatprep.subr.mxu0 0.0
      %365 = vmatpush1.msra.mxu0 0.0
      %366 = vmatprep.subr.mxu0 0.0
      %367 = vmatpush1.msra.mxu0 0.0
      %368 = vmatprep.subr.mxu0 0.0
      %369 = vmatpush1.msra.mxu0 0.0
      %370 = vmatprep.subr.mxu0 0.0
      %371 = vmatpush1.msra.mxu0 0.0
      %372 = vmatprep.subr.mxu0 0.0
      %373 = vmatpush1.msra.mxu0 0.0
      %374 = vmatprep.subr.mxu0 0.0
      %375 = vmatpush1.msra.mxu0 0.0
      %376 = vmatprep.subr.mxu0 0.0
      %377 = vmatpush1.msra.mxu0 0.0
      %378 = vmatprep.subr.mxu0 0.0
      %379 = vmatpush1.msra.mxu0 0.0
      %380 = vmatprep.subr.mxu0 0.0
      %381 = vmatpush1.msra.mxu0 0.0
      %382 = vmatprep.subr.mxu0 0.0
      %383 = vmatpush1.msra.mxu0 0.0
      %384 = vmatprep.subr.mxu0 0.0
      %385 = vmatpush1.msra.mxu0 0.0
      %386 = vmatprep.subr.mxu0 0.0
      %387 = vmatpush1.msra.mxu0 0.0
      %388 = vmatprep.subr.mxu0 0.0
      %389 = vmatpush1.msra.mxu0 0.0
      %390 = vmatprep.mubr.f32.mxu0 0.0
      %391 = vmatmul.mubr.f32.gmra.mrb[0].mxu0 %v247
      %v392 = vpop.f32.mrb[0].mxu0
      %v393 = vadd.f32 %v242, %v392
      %v394 = vpop.f32.mrb[0].mxu0
      %395 = vdwg.mxu0
      %v396 = vmax.f32 %v393, 0.0
      %v397 = vadd.f32 %v322, %v396
      %v398 = vmul.f32 %v244, 2.0
      %vm399 = vcmask 15360
      %v401 = vsel %vm399, %v243, 0
      %vm403 = vcmask 1041408
      %v405 = vsel %vm403, %v397, 0
      %407 = vmatprep.subr.mxu0 0.0
      %408 = vmatpush1.msra.mxu0 %v405
      %409 = vmatprep.subr.mxu0 0.0
      %410 = vmatpush1.msra.mxu0 0.0
      %411 = vmatprep.subr.mxu0 0.0
      %412 = vmatpush1.msra.mxu0 0.0
      %413 = vmatprep.subr.mxu0 0.0
      %414 = vmatpush1.msra.mxu0 0.0
      %415 = vmatprep.subr.mxu0 0.0
      %416 = vmatpush1.msra.mxu0 0.0
      %417 = vmatprep.subr.mxu0 0.0
      %418 = vmatpush1.msra.mxu0 0.0
      %419 = vmatprep.subr.mxu0 0.0
      %420 = vmatpush1.msra.mxu0 0.0
      %421 = vmatprep.subr.mxu0 0.0
      %422 = vmatpush1.msra.mxu0 0.0
      %423 = vmatprep.subr.mxu0 0.0
      %424 = vmatpush1.msra.mxu0 0.0
      %425 = vmatprep.subr.mxu0 0.0
      %426 = vmatpush1.msra.mxu0 0.0
      %427 = vmatprep.subr.mxu0 0.0
      %428 = vmatpush1.msra.mxu0 0.0
      %429 = vmatprep.subr.mxu0 0.0
      %430 = vmatpush1.msra.mxu0 0.0
      %431 = vmatprep.subr.mxu0 0.0
      %432 = vmatpush1.msra.mxu0 0.0
      %433 = vmatprep.subr.mxu0 0.0
      %434 = vmatpush1.msra.mxu0 0.0
      %435 = vmatprep.subr.mxu0 0.0
      %436 = vmatpush1.msra.mxu0 0.0
      %437 = vmatprep.subr.mxu0 0.0
      %438 = vmatpush1.msra.mxu0 0.0
      %439 = vmatprep.subr.mxu0 0.0
      %440 = vmatpush1.msra.mxu0 0.0
      %441 = vmatprep.subr.mxu0 0.0
      %442 = vmatpush1.msra.mxu0 0.0
      %443 = vmatprep.subr.mxu0 0.0
      %444 = vmatpush1.msra.mxu0 0.0
      %445 = vmatprep.subr.mxu0 0.0
      %446 = vmatpush1.msra.mxu0 0.0
      %447 = vmatprep.subr.mxu0 0.0
      %448 = vmatpush1.msra.mxu0 0.0
      %449 = vmatprep.subr.mxu0 0.0
      %450 = vmatpush1.msra.mxu0 0.0
      %451 = vmatprep.subr.mxu0 0.0
      %452 = vmatpush1.msra.mxu0 0.0
      %453 = vmatprep.subr.mxu0 0.0
      %454 = vmatpush1.msra.mxu0 0.0
      %455 = vmatprep.subr.mxu0 0.0
      %456 = vmatpush1.msra.mxu0 0.0
      %457 = vmatprep.subr.mxu0 0.0
      %458 = vmatpush1.msra.mxu0 0.0
      %459 = vmatprep.subr.mxu0 0.0
      %460 = vmatpush1.msra.mxu0 0.0
      %461 = vmatprep.subr.mxu0 0.0
      %462 = vmatpush1.msra.mxu0 0.0
      %463 = vmatprep.subr.mxu0 0.0
      %464 = vmatpush1.msra.mxu0 0.0
      %465 = vmatprep.subr.mxu0 0.0
      %466 = vmatpush1.msra.mxu0 0.0
      %467 = vmatprep.subr.mxu0 0.0
      %468 = vmatpush1.msra.mxu0 0.0
      %469 = vmatprep.subr.mxu0 0.0
      %470 = vmatpush1.msra.mxu0 0.0
      %471 = vmatprep.mubr.f32.mxu0 0.0
      %472 = vmatmul.mubr.f32.gmra.mrb[0].mxu0 %v401
      %v473 = vpop.f32.mrb[0].mxu0
      %v474 = vadd.f32 %v398, %v473
      %v475 = vpop.f32.mrb[0].mxu0
      %476 = vdwg.mxu0
      %v477 = vxor.u32 %v474, 2147483648
      %v478 = vmul.f32 %v477, 1.442695
      %v479 = vpow.pop %v478
      %v480 = vadd.f32 %v479, 1.0
      %v481 = vrcp.pop %v480
      %v482 = vmul.f32 1.0, %v481
      %484 = vset.pattern.permute.xlu0 0
      %485 = vperm.xlu0 %484, %v482
      %v486 = vpop.permute.xlu0 %485
      %v488 = vunpack.c.l.s4 839922192
      %v489 = vunpack.c.0.s8 %v488
      %v490 = vlaneseq
      %v491 = vshrl.u32 %v490, 7
      %v492 = vsub.s32 %v489, %v491
      %v493 = vrot.slane %v486, %v492
      %v495 = vmul.f32 %v225, %v493
      %496 = vst [vmem:[%s224] sm:$0xff] %v495
      %p497 = scmp.lt.s32.totalorder %s16, 1
      %s498 = scalar_select %p497, %s16, 1
      %s499 = smul.addr %s498, 2
      %s500 = smul.addr %s499, 4
      %s501 = scalar_lea.vmem %s5, %s500
      // Predicated region
      $region41: #{channel_attention.1} parent=39 // pred_check
        %p502 = pneg %p144
      $region42: #{channel_attention.1} parent=39 // pred_check_branch
        %504 = sbr.rel (%p502) target = $region44
      $region43: #{channel_attention.1} parent=39 // pred_region
        _
      $region44: #{channel_attention.1} parent=39 // pred_fallthru
        _
    $region40: #{channel_attention.1} parent=5 // pred_fallthru
      _
    %p505 = scmp.le.s32.totalorder 2, %s11
    // Predicated region
    $region45: #{channel_attention.1} parent=5 // pred_check
      %p506 = pneg %p505
    $region46: #{channel_attention.1} parent=5 // pred_check_branch
      %508 = sbr.rel (%p506) target = $region48
    $region47: #{channel_attention.1} parent=5 // pred_region
      %s509 = ssub.s32 %s11, 2
      // Predicated region
      $region49: #{channel_attention.1} parent=47 // pred_check
        %p510 = pneg %p150
      $region50: #{channel_attention.1} parent=47 // pred_check_branch
        %512 = sbr.rel (%p510) target = $region52
      $region51: #{channel_attention.1} parent=47 // pred_region
        %p513 = scmp.lt.s32.totalorder %s17, 1
        %s514 = scalar_select %p513, %s17, 1
        %s515 = smul.addr %s514, 2
        %s516 = smul.addr %s515, 4
        %s517 = scalar_lea.vmem %s5, %s516
      $region52: #{channel_attention.1} parent=47 // pred_fallthru
        _
    $region48: #{channel_attention.1} parent=5 // pred_fallthru
      _
  $region6: #{channel_attention.1} parent=0 // loop_footer
    %s15 = sadd.s32 1, %s11
  $region7: #{channel_attention.1} parent=0 // loop_footer_branch
    %10 = sbr.rel target = $region3
  $region8: #{channel_attention.1} parent=0 // loop_exit
    _

</llo_original>
